<compile_context>
chip_gen: v7x
topology: tpu7x:2x2x1
jax: 0.10.0
libtpu: 0.0.40
codegen_flags: <defaults>
</compile_context>

<pallas_src>
import math

import jax
import jax.numpy as jnp
from jax.experimental import pallas as pl
from jax.experimental.pallas import tpu as pltpu


# --------------------------------------------------------------------------
# Hardware-aware sizing helpers
# --------------------------------------------------------------------------
def _vmem_capacity_bytes():
    try:
        return int(pltpu.get_tpu_info().vmem_capacity_bytes)
    except Exception:
        return 64 << 20  # v7x per-core VMEM: smallest of the targeted chips


def _default_tile_budget():
    # Per-buffer tile budget. The double-buffered footprint is ~4x this
    # (2 buffers x (in tile + out tile)), which stays inside the scoped-VMEM
    # limit requested below on v5e / v6e / v7x.
    return max(1 << 20, min(4 << 20, _vmem_capacity_bytes() // 16))


def _vmem_limit_bytes(block_bytes):
    need = 4 * block_bytes + (8 << 20)          # 2 x (in + out) + headroom
    limit = max(32 << 20, need)
    return int(min(limit, int(_vmem_capacity_bytes() * 0.9)))


# --------------------------------------------------------------------------
# Tiling helpers
# --------------------------------------------------------------------------
def _largest_divisor_at_most(n, cap):
    cap = min(n, max(1, cap))
    best, d = 1, 1
    while d * d <= n:
        if n % d == 0:
            q = n // d
            if d <= cap and d > best:
                best = d
            if q <= cap and q > best:
                best = q
        d += 1
    return best


def _split_cols(L, itemsize, budget):
    """Factor the per-sample flat length L into (R, C), C lane-dense if possible."""
    if L % 128 == 0:
        C = 128
        # Grow C while it still divides L and one row stays <= 4 KiB.
        while L % (C * 2) == 0 and (C * 2) * itemsize <= 4096:
            C *= 2
        return L // C, C
    # Lane-sparse fallback (L not a multiple of 128): largest divisor of L that
    # still fits in one tile, so we never allocate an oversized VMEM block.
    C = _largest_divisor_at_most(L, max(1, budget // itemsize))
    return L // C, C


def _pick_row_tile(R, C, itemsize, sub, budget):
    """Largest multiple of `sub` that divides R and fits the tile budget."""
    max_rows = budget // (C * itemsize)
    if max_rows < sub or R % sub != 0:
        return None
    cap = min(R, (max_rows // sub) * sub)
    best = None
    for t in range(sub, cap + 1, sub):
        if R % t == 0:
            best = t
    return best


# --------------------------------------------------------------------------
# Mode A: per-sample grid with SMEM scalar prefetch + dropped-sample read skip
# --------------------------------------------------------------------------
def _drop_path_per_sample(x3, mask, keep_prob, tr, budget):
    B, R, C = x3.shape
    itemsize = jnp.dtype(x3.dtype).itemsize
    J = R // tr
    inv = 1.0 / keep_prob                       # compile-time constant
    mask_i32 = mask.astype(jnp.int32)           # (B,) 0/1, lands in SMEM

    def kernel(mask_ref, x_ref, o_ref):
        b = pl.program_id(0)

        @pl.when(mask_ref[b] == 0)
        def _():
            # Dropped sample: write zeros, never read x_ref.
            o_ref[...] = jnp.zeros_like(o_ref)

        @pl.when(mask_ref[b] != 0)
        def _():
            # Multiply in the native dtype (weak-typed python float scale).
            o_ref[...] = (x_ref[...] * inv).astype(o_ref.dtype)

    def x_index_map(b, j, mask_ref):
        keep = mask_ref[b]
        # Dropped samples all map to block (0,0,0): consecutive dropped steps
        # revisit the same block, so their input DMAs are skipped entirely.
        return (b * keep, j * keep, 0)

    block_bytes = tr * C * itemsize
    grid_spec = pltpu.PrefetchScalarGridSpec(
        num_scalar_prefetch=1,
        grid=(B, J),
        in_specs=[pl.BlockSpec((1, tr, C), x_index_map)],
        out_specs=pl.BlockSpec((1, tr, C), lambda b, j, m: (b, j, 0)),
    )
    return pl.pallas_call(
        kernel,
        out_shape=jax.ShapeDtypeStruct((B, R, C), x3.dtype),
        grid_spec=grid_spec,
        compiler_params=pltpu.CompilerParams(
            dimension_semantics=("parallel", "parallel"),
            vmem_limit_bytes=_vmem_limit_bytes(block_bytes)),
    )(mask_i32, x3)


# --------------------------------------------------------------------------
# Mode B: batch-collapsed tiles (small per-sample payloads)
# --------------------------------------------------------------------------
def _drop_path_rows(x3, mask, keep_prob, budget, sub):
    B, R, C = x3.shape
    itemsize = jnp.dtype(x3.dtype).itemsize

    max_rows = max(1, budget // (C * itemsize))
    if R <= max_rows:
        TR = R
    else:
        TR = _largest_divisor_at_most(R, max_rows)
        if TR != R and TR % 8 != 0:
            # Block's second-to-last dim must be a multiple of 8 or the full
            # extent; fall back to the full extent for ragged R.
            # TODO(synk): very large ragged R may prefer host-side padding.
            TR = R
    TB = _largest_divisor_at_most(B, max(1, budget // (TR * C * itemsize)))

    # Per-sample fused scale in the input dtype (matches torch x.div(keep_prob)).
    scale = (mask / keep_prob).astype(x3.dtype).reshape(B, 1, 1)

    def kernel(x_ref, s_ref, o_ref):
        o_ref[...] = (x_ref[...] * s_ref[...]).astype(o_ref.dtype)

    block_bytes = TB * TR * C * itemsize
    return pl.pallas_call(
        kernel,
        out_shape=jax.ShapeDtypeStruct((B, R, C), x3.dtype),
        grid=(B // TB, R // TR),
        in_specs=[
            pl.BlockSpec((TB, TR, C), lambda i, j: (i, j, 0)),
            pl.BlockSpec((TB, 1, 1), lambda i, j: (i, 0, 0)),
        ],
        out_specs=pl.BlockSpec((TB, TR, C), lambda i, j: (i, j, 0)),
        compiler_params=pltpu.CompilerParams(
            dimension_semantics=("parallel", "parallel"),
            vmem_limit_bytes=_vmem_limit_bytes(block_bytes)),
    )(x3, scale)


# --------------------------------------------------------------------------
# Public wrapper (matches DropPath.forward / drop_path()).
# --------------------------------------------------------------------------
def drop_path_pallas(x, drop_prob, training, key, *, tile_budget_bytes=None):
    # PyTorch returns x when drop_prob == 0.0 or not training.
    # (drop_prob=None in training would raise in PyTorch; treat as identity.)
    if drop_prob is None or drop_prob == 0.0 or not training:
        return x

    keep_prob = 1.0 - float(drop_prob)
    B = x.shape[0]
    L = math.prod(x.shape[1:])
    if B == 0 or L == 0:
        return x

    itemsize = jnp.dtype(x.dtype).itemsize
    budget = int(tile_budget_bytes) if tile_budget_bytes else _default_tile_budget()

    # Per-sample Bernoulli(keep_prob) mask, same construction as the PyTorch
    # code: floor(keep_prob + U[0,1)).
    u = jax.random.uniform(key, (B,), jnp.float32)
    mask = jnp.floor(keep_prob + u)  # (B,) of 0.0 / 1.0

    R, C = _split_cols(L, itemsize, budget)
    x3 = x.reshape(B, R, C)  # contiguous view, no data movement

    sub = {1: 32, 2: 16}.get(itemsize, 8)     # dtype-aware sublane multiple
    tr = _pick_row_tile(R, C, itemsize, sub, budget)

    if tr is not None and R // tr >= 2:
        # Large per-sample payload: per-sample grid, SMEM mask, read-skip.
        out = _drop_path_per_sample(x3, mask, keep_prob, tr, budget)
    else:
        # Small per-sample payload: pack many samples into each block.
        out = _drop_path_rows(x3, mask, keep_prob, budget, sub)
    return out.reshape(x.shape)


# --------------------------------------------------------------------------
# Pure-JAX reference (mirrors the PyTorch drop_path, same mask construction).
# --------------------------------------------------------------------------
def drop_path_reference(x, drop_prob, training, key):
    if drop_prob is None or drop_prob == 0.0 or not training:
        return x
    keep_prob = 1.0 - float(drop_prob)
    B = x.shape[0]
    u = jax.random.uniform(key, (B,), jnp.float32)
    mask = jnp.floor(keep_prob + u)
    bshape = (B,) + (1,) * (x.ndim - 1)
    return (x / keep_prob) * mask.reshape(bshape).astype(x.dtype)


if __name__ == "__main__":
    key = jax.random.PRNGKey(0)
    kx, km = jax.random.split(key)

    # Typical transformer token tensor for DropPath: (batch, seq, hidden).
    # Small payload -> batch-collapsed "rows" mode.
    B, S, Hd = 2, 8, 32
    x = jax.random.normal(kx, (B, S, Hd), jnp.float32)
    drop_prob = 0.25
    out = jax.block_until_ready(drop_path_pallas(x, drop_prob, True, km))
    ref = drop_path_reference(x, drop_prob, True, km)
    assert out.shape == x.shape, out.shape
    assert jnp.allclose(out, ref, atol=1e-5, rtol=1e-5), \
        float(jnp.max(jnp.abs(out - ref)))

    # Eval mode / drop_prob == 0 are exact identities (matches the module).
    assert jnp.array_equal(drop_path_pallas(x, drop_prob, False, km), x)
    assert jnp.array_equal(drop_path_pallas(x, 0.0, True, km), x)

    # 4D NCHW-style input (L = 1024), rows mode.
    x4 = jax.random.normal(kx, (2, 4, 16, 16), jnp.float32)
    out4 = jax.block_until_ready(drop_path_pallas(x4, 0.5, True, km))
    ref4 = drop_path_reference(x4, 0.5, True, km)
    assert jnp.allclose(out4, ref4, atol=1e-5, rtol=1e-5)

    # Odd shape exercising the lane-sparse fallback (L = 35).
    x6 = jax.random.normal(kx, (3, 5, 7), jnp.float32)
    out6 = jax.block_until_ready(drop_path_pallas(x6, 0.3, True, km))
    ref6 = drop_path_reference(x6, 0.3, True, km)
    assert jnp.allclose(out6, ref6, atol=1e-5, rtol=1e-5)

    # bf16 input exercising the dtype-aware (sublane=16, native-dtype) path.
    x8 = jax.random.normal(kx, (4, 16, 256), jnp.float32).astype(jnp.bfloat16)
    out8 = jax.block_until_ready(drop_path_pallas(x8, 0.25, True, km))
    ref8 = drop_path_reference(x8, 0.25, True, km)
    assert jnp.allclose(out8.astype(jnp.float32), ref8.astype(jnp.float32),
                        atol=5e-2, rtol=5e-2)

    # Force the per-sample grid + SMEM scalar prefetch + read-skip path by
    # shrinking the tile budget (per-sample payload spans multiple tiles).
    x7 = jax.random.normal(kx, (2, 64, 1024), jnp.float32)
    out7 = jax.block_until_ready(
        drop_path_pallas(x7, 0.5, True, km, tile_budget_bytes=64 * 1024))
    ref7 = drop_path_reference(x7, 0.5, True, km)
    assert jnp.allclose(out7, ref7, atol=1e-5, rtol=1e-5)

    print("KERNEL_OK")
</pallas_src>

<mosaic_0001>
module attributes {stable_mosaic.version = 11 : i64} {
  func.func @kernel(%arg0: i32, %arg1: i32, %arg2: memref<2x1x256xf32, #tpu.memory_space<vmem>>, %arg3: memref<2x1x1xf32, #tpu.memory_space<vmem>>, %arg4: memref<2x1x256xf32, #tpu.memory_space<vmem>>) attributes {dimension_semantics = [#tpu.dimension_semantics<parallel>, #tpu.dimension_semantics<parallel>], iteration_bounds = array<i64: 1, 1>, scalar_prefetch = 0 : i64, scratch_operands = 0 : i64, tpu.core_type = #tpu.core_type<tc>, window_params = [{transform_indices = @transform_0, window_bounds = array<i64: 2, 1, 256>}, {transform_indices = @transform_1, window_bounds = array<i64: 2, 1, 1>}, {transform_indices = @transform_2, window_bounds = array<i64: 2, 1, 256>}]} {
    %c0 = arith.constant 0 : index
    %c0_0 = arith.constant 0 : index
    %c0_1 = arith.constant 0 : index
    %0 = vector.load %arg2[%c0, %c0_0, %c0_1] : memref<2x1x256xf32, #tpu.memory_space<vmem>>, vector<2x1x256xf32>
    %c0_2 = arith.constant 0 : index
    %c0_3 = arith.constant 0 : index
    %c0_4 = arith.constant 0 : index
    %1 = vector.load %arg3[%c0_2, %c0_3, %c0_4] : memref<2x1x1xf32, #tpu.memory_space<vmem>>, vector<2x1x1xf32>
    %2 = vector.broadcast %1 : vector<2x1x1xf32> to vector<2x1x256xf32>
    %3 = arith.mulf %0, %2 : vector<2x1x256xf32>
    %c0_5 = arith.constant 0 : index
    %c0_6 = arith.constant 0 : index
    %c0_7 = arith.constant 0 : index
    %4 = vector.load %arg4[%c0_5, %c0_6, %c0_7] : memref<2x1x256xf32, #tpu.memory_space<vmem>>, vector<2x1x256xf32>
    tpu.vector_store %arg4[%c0_5, %c0_6, %c0_7], %3 {strides = array<i32>} : memref<2x1x256xf32, #tpu.memory_space<vmem>>, vector<2x1x256xf32>,
    return
  }
  func.func @transform_0(%arg0: i32, %arg1: i32) -> (i32, i32, i32) {
    %c0_i32 = arith.constant 0 : i32
    %c0_i32_0 = arith.constant 0 : i32
    return %arg0, %arg1, %c0_i32 : i32, i32, i32
  }
  func.func @transform_1(%arg0: i32, %arg1: i32) -> (i32, i32, i32) {
    %c0_i32 = arith.constant 0 : i32
    %c0_i32_0 = arith.constant 0 : i32
    %c0_i32_1 = arith.constant 0 : i32
    return %arg0, %c0_i32, %c0_i32_0 : i32, i32, i32
  }
  func.func @transform_2(%arg0: i32, %arg1: i32) -> (i32, i32, i32) {
    %c0_i32 = arith.constant 0 : i32
    %c0_i32_0 = arith.constant 0 : i32
    return %arg0, %arg1, %c0_i32 : i32, i32, i32
  }
}

</mosaic_0001>

<llo_original>
// kernel: tpu_custom_call.1
$region0: #{tpu_custom_call.1}
  #allocation0 [shape = 'u32[]', space=smem, size = 0x4, offset = 0x4, fixed_abs, tag = 'smem constant byte address 0x4 - core index']
  #allocation1 [shape = 'u32[144,128]{1,0:T(1,128)}', space=vmem, size = 0x12000, scoped, tag = 'internal scratch']
  %s0 = inlined_call_operand.hbm [shape: f32[2,1,256], index: 0, kind: input, shape index: {}]
  %s1 = inlined_call_operand.vmem [shape: f32[2,1,1], index: 1, kind: input, shape index: {}]
  %s2 = inlined_call_operand.hbm [shape: f32[2,1,256], index: 2, kind: output, shape index: {}]
  %s3 = sld [smem:[#allocation0]]
  $region22: #{tpu_custom_call.1} parent=0
    _
  %s5 = ssub.s32 1, %s3
  %s6 = scalar_select 0, %s5, %s3
  $region1: #{tpu_custom_call.1} parent=0
    #allocation2 [shape = 'u8[2048]{0}', space=vmem, size = 0x800, scoped, tag = 'input window, operand 0, single buffered']
    #allocation3 [shape = 's32[1]{0}', space=sflag, size = 0x4, scoped, tag = 'scoped memory for tpu_custom_call.1']
    #allocation4 [shape = 's32[1]{0}', space=sflag, size = 0x4, scoped, tag = 'scoped memory for tpu_custom_call.1']
    #allocation5 [shape = 'u8[2048]{0}', space=vmem, size = 0x800, scoped, tag = 'output window, operand 0, single buffered']
    %7 = vsyncpa [#allocation3], 0
    %8 = vsyncpa [#allocation4], 0
    // Predicated region
    $region2: #{tpu_custom_call.1} parent=1 // pred_check
      _
    $region3: #{tpu_custom_call.1} parent=1 // pred_check_branch
      %10 = sbr.rel (0) target = $region5
    $region4: #{tpu_custom_call.1} parent=1 // pred_region
      %s12 = ssub.s32 64, 64
      %13 = vsyncadd [#allocation3], %s12
      %s14 = sshll.u32 [#allocation2], 4
      %s15 = int_to_ptr.vmem [resolvable:$true] %s14
      %20 = dma.hbm_to_vmem [thread:$0]  %s0, 64, %s15, [#allocation3], 32, 32, 2
    $region5: #{tpu_custom_call.1} parent=1 // pred_fallthru
      _
    // Predicated region
    $region6: #{tpu_custom_call.1} parent=1 // pred_check
      _
    $region7: #{tpu_custom_call.1} parent=1 // pred_check_branch
      %22 = sbr.rel (0) target = $region9
    $region8: #{tpu_custom_call.1} parent=1 // pred_region
      _
    $region9: #{tpu_custom_call.1} parent=1 // pred_fallthru
      _
    // Predicated region
    $region10: #{tpu_custom_call.1} parent=1 // pred_check
      _
    $region11: #{tpu_custom_call.1} parent=1 // pred_check_branch
      %24 = sbr.rel (0) target = $region13
    $region12: #{tpu_custom_call.1} parent=1 // pred_region
      %25 = dma.done [#allocation3], 64
    $region13: #{tpu_custom_call.1} parent=1 // pred_fallthru
      _
    %v26 = vld [vmem:[#allocation2] sm:$0x3]
    %v27 = vld [vmem:[#allocation2 + $0x2] sm:$0x3]
    %v28 = vld [vmem:[%s1] sm:$0x1]
    %v29 = vld [vmem:[%s1 + $0x1] sm:$0x1]
    %31 = vset.pattern.permute.xlu0 0
    %32 = vperm.xlu0 %31, %v28
    %v33 = vpop.permute.xlu0 %32
    %v35 = vlaneseq
    %v36 = vshrl.u32 %v35, 7
    %v37 = vsub.s32 0, %v36
    %v38 = vrot.slane %v33, %v37
    %40 = vset.pattern.permute.xlu0 0
    %41 = vperm.xlu0 %40, %v29
    %v42 = vpop.permute.xlu0 %41
    %v44 = vlaneseq
    %v45 = vshrl.u32 %v44, 7
    %v46 = vsub.s32 0, %v45
    %v47 = vrot.slane %v42, %v46
    %v48 = vmul.f32 %v26, %v38
    %v49 = vmul.f32 %v27, %v47
    %v50 = vlaneseq
    %vm51 = vcmp.ge.s32.totalorder %v50, 0
    %vm52 = vcmp.lt.s32.totalorder %v50, 256
    %vm53 = vmand %vm51, %vm52
    %54 = vst.msk [vmem:[#allocation5] sm:$0x3] %vm53, %v48
    %55 = vst.msk [vmem:[#allocation5 + $0x2] sm:$0x3] %vm53, %v49
    // Predicated region
    $region14: #{tpu_custom_call.1} parent=1 // pred_check
      _
    $region15: #{tpu_custom_call.1} parent=1 // pred_check_branch
      %57 = sbr.rel (0) target = $region17
    $region16: #{tpu_custom_call.1} parent=1 // pred_region
      %s59 = ssub.s32 64, 64
      %60 = vsyncadd [#allocation4], %s59
      %s61 = sshll.u32 [#allocation5], 4
      %s62 = int_to_ptr.vmem [resolvable:$true] %s61
      %67 = dma.vmem_to_hbm [thread:$0]  %s62, 64, %s2, [#allocation4], 32, 32, 2
    $region17: #{tpu_custom_call.1} parent=1 // pred_fallthru
      _
    // Predicated region
    $region18: #{tpu_custom_call.1} parent=1 // pred_check
      _
    $region19: #{tpu_custom_call.1} parent=1 // pred_check_branch
      %69 = sbr.rel (0) target = $region21
    $region20: #{tpu_custom_call.1} parent=1 // pred_region
      %70 = dma.done [#allocation4], 64
    $region21: #{tpu_custom_call.1} parent=1 // pred_fallthru
      _
    %71 = vsyncpa [#allocation3], 1
    %72 = vsyncpa [#allocation4], 1

</llo_original>
